<compile_context>
chip_gen: v5e
topology: v5e:2x2
jax: 0.10.0
libtpu: 0.0.40
codegen_flags: <defaults>
</compile_context>

<pallas_src>
from functools import partial

import numpy as np
import jax
import jax.numpy as jnp
from jax import lax
from jax.experimental import pallas as pl
from jax.experimental.pallas import tpu as pltpu


# ----------------------------------------------------------------------------- helpers
def upsample_matrix_np(n_in: int) -> np.ndarray:
    """(2*n_in, n_in) interpolation matrix for bilinear upsample, scale=2, align_corners=True."""
    n_out = 2 * n_in
    A = np.zeros((n_out, n_in), dtype=np.float32)
    if n_out == 1:
        A[0, 0] = 1.0
        return A
    scale = (n_in - 1) / (n_out - 1)
    for i in range(n_out):
        s = i * scale
        i0 = min(int(np.floor(s)), n_in - 1)
        i1 = min(i0 + 1, n_in - 1)
        w1 = s - i0
        A[i, i0] += 1.0 - w1
        A[i, i1] += w1
    return A


def _tap_masks_np(H2: int, W2: int) -> np.ndarray:
    """(9, H2*W2) validity mask per 3x3 tap (implements the conv's zero padding)."""
    L = H2 * W2
    ys, xs = np.arange(L) // W2, np.arange(L) % W2
    masks = np.zeros((9, L), dtype=np.float32)
    for t in range(9):
        dy, dx = t // 3, t % 3
        ok = ((ys + dy - 1 >= 0) & (ys + dy - 1 < H2) &
              (xs + dx - 1 >= 0) & (xs + dx - 1 < W2))
        masks[t] = ok.astype(np.float32)
    return masks


# Tiny probe: determine pltpu.roll's direction convention once (vs np.roll) so the
# tap shifts below are sign-safe regardless of the lowering's rotation convention.
def _roll_probe_kernel(x_ref, o_ref):
    o_ref[...] = pltpu.roll(x_ref[...], shift=1, axis=1)


def _roll_matches_numpy() -> bool:
    x = jnp.tile(jnp.arange(128, dtype=jnp.float32)[None, :], (8, 1))
    out = pl.pallas_call(
        _roll_probe_kernel,
        out_shape=jax.ShapeDtypeStruct((8, 128), jnp.float32),
    )(x)
    out = jax.device_get(out)
    # np.roll(row, 1)[1] == row[0] == 0
    return bool(out[0, 1] == 0.0)


# ----------------------------------------------------------------------------- kernel 1
def _decode_kernel(shifts, x_ref, kupT_ref, mask_ref, wbd_ref, y_ref, stats_ref):
    # x_ref:     (NB*Cin, H*W)         input block, spatial flattened
    # kupT_ref:  (H*W, L)              kron(Ah, Aw)^T  -- bilinear upsample as one matmul
    # mask_ref:  (9, L)                zero-padding validity mask per tap
    # wbd_ref:   (NB*Cout, 9*NB*Cin)   block-diagonal (over samples) conv weights
    # y_ref:     (NB*Cout, L)          conv output (pre-BN), lane-dense
    # stats_ref: (NB*Cout, 2)          per-row [sum, sum of squares] for BN statistics
    u = jnp.dot(x_ref[...], kupT_ref[...], preferred_element_type=jnp.float32)  # (NB*Cin, L)

    masks = mask_ref[...]                                   # (9, L)
    taps = []
    for t, sh in enumerate(shifts):                          # unrolled, 9 taps
        r = u if sh == 0 else pltpu.roll(u, shift=sh, axis=1)   # XLU lane rotation
        taps.append(r * masks[t:t + 1, :])                   # zero the wrapped / OOB lanes
    b = jnp.concatenate(taps, axis=0)                        # (9*NB*Cin, L) im2col stack

    y = jnp.dot(wbd_ref[...], b, preferred_element_type=jnp.float32)   # (NB*Cout, L)
    y_ref[...] = y.astype(y_ref.dtype)

    # per-sample/per-channel partial BN statistics (keeps the batch grid axis parallel)
    stats_ref[:, 0:1] = jnp.sum(y, axis=1, keepdims=True)
    stats_ref[:, 1:2] = jnp.sum(y * y, axis=1, keepdims=True)


# ----------------------------------------------------------------------------- kernel 2
def _bn_relu_kernel(y_ref, sc_ref, sh_ref, o_ref):
    # Fused lane-dense BN affine + ReLU: (rows, L) * (rows, 1) + (rows, 1).
    o_ref[...] = jnp.maximum(y_ref[...] * sc_ref[...] + sh_ref[...], 0.0)


# ----------------------------------------------------------------------------- wrapper
def decode_block_forward(x, conv_w, gamma, beta, eps=1e-5):
    N, Cin, H, W = x.shape
    Cout = conv_w.shape[0]
    H2, W2 = 2 * H, 2 * W
    HW, L = H * W, H2 * W2

    # samples per grid step (largest divisor of N up to 8) -- amortizes per-step overhead
    NB = 1
    for d in range(min(N, 8), 0, -1):
        if N % d == 0:
            NB = d
            break
    grid = (N // NB,)

    ah = upsample_matrix_np(H)                               # (H2, H)
    aw = upsample_matrix_np(W)                               # (W2, W)
    kupT = jnp.asarray(np.kron(ah, aw).T)                    # (HW, L)
    masks = jnp.asarray(_tap_masks_np(H2, W2))               # (9, L)

    # Block-diagonal conv weights: column block t holds kron(I_NB, conv_w[:, :, dy, dx]).
    eye = jnp.eye(NB, dtype=jnp.float32)
    wbd = jnp.concatenate(
        [jnp.kron(eye, conv_w[:, :, t // 3, t % 3].astype(jnp.float32)) for t in range(9)],
        axis=1)                                              # (NB*Cout, 9*NB*Cin)

    # Flat-index shift per tap: tap[n] = u[n + s] (masked), s = (dy-1)*W2 + (dx-1).
    np_conv = _roll_matches_numpy()
    shifts = []
    for t in range(9):
        dy, dx = t // 3, t % 3
        s = (dy - 1) * W2 + (dx - 1)
        shifts.append(((-s) % L) if np_conv else (s % L))
    shifts = tuple(shifts)

    x2 = x.reshape(N * Cin, HW).astype(jnp.float32)          # lane-dense input slab

    y, stats = pl.pallas_call(
        partial(_decode_kernel, shifts),
        grid=grid,
        in_specs=[
            pl.BlockSpec((NB * Cin, HW), lambda n: (n, 0)),
            pl.BlockSpec((HW, L), lambda n: (0, 0)),            # resident constant
            pl.BlockSpec((9, L), lambda n: (0, 0)),              # resident constant
            pl.BlockSpec((NB * Cout, 9 * NB * Cin), lambda n: (0, 0)),
        ],
        out_specs=[
            pl.BlockSpec((NB * Cout, L), lambda n: (n, 0)),
            pl.BlockSpec((NB * Cout, 2), lambda n: (n, 0)),
        ],
        out_shape=[
            jax.ShapeDtypeStruct((N * Cout, L), jnp.float32),
            jax.ShapeDtypeStruct((N * Cout, 2), jnp.float32),
        ],
        compiler_params=pltpu.CompilerParams(dimension_semantics=("parallel",)),
    )(x2, kupT, masks, wbd)

    # BatchNorm2d training-mode statistics (biased variance over N, H2, W2).
    # TODO(synk): running_mean / running_var buffer updates are stateful and not emitted.
    count = float(N) * float(L)
    sums = stats[:, 0].reshape(N, Cout).sum(axis=0)
    sumsq = stats[:, 1].reshape(N, Cout).sum(axis=0)
    mean = sums / count
    var = sumsq / count - mean * mean
    scale = gamma.astype(jnp.float32) / jnp.sqrt(var + eps)
    shift = beta.astype(jnp.float32) - mean * scale
    sc = jnp.tile(scale, N).reshape(N * Cout, 1)
    sh = jnp.tile(shift, N).reshape(N * Cout, 1)

    rb = NB * Cout
    out = pl.pallas_call(
        _bn_relu_kernel,
        grid=grid,
        in_specs=[
            pl.BlockSpec((rb, L), lambda n: (n, 0)),
            pl.BlockSpec((rb, 1), lambda n: (n, 0)),
            pl.BlockSpec((rb, 1), lambda n: (n, 0)),
        ],
        out_specs=pl.BlockSpec((rb, L), lambda n: (n, 0)),
        out_shape=jax.ShapeDtypeStruct((N * Cout, L), jnp.float32),
        compiler_params=pltpu.CompilerParams(dimension_semantics=("parallel",)),
    )(y, sc, sh)

    return out.reshape(N, Cout, H2, W2)


# ----------------------------------------------------------------------------- reference
def ref_forward(x, conv_w, gamma, beta, eps=1e-5):
    """Pure-JAX reference with identical semantics (upsample -> conv -> BN(train) -> ReLU)."""
    _, _, H, W = x.shape
    ah = jnp.asarray(upsample_matrix_np(H))
    aw = jnp.asarray(upsample_matrix_np(W))
    u = jnp.einsum('ph,nchw->ncpw', ah, x, precision=lax.Precision.HIGHEST)
    u = jnp.einsum('ncpw,qw->ncpq', u, aw, precision=lax.Precision.HIGHEST)
    y = lax.conv_general_dilated(u, conv_w, (1, 1), 'SAME',
                                 dimension_numbers=('NCHW', 'OIHW', 'NCHW'),
                                 precision=lax.Precision.HIGHEST)
    mean = y.mean(axis=(0, 2, 3), keepdims=True)
    var = jnp.var(y, axis=(0, 2, 3), keepdims=True)          # biased, as in BN training
    yn = (y - mean) / jnp.sqrt(var + eps)
    yn = yn * gamma.reshape(1, -1, 1, 1) + beta.reshape(1, -1, 1, 1)
    return jnp.maximum(yn, 0.0)


if __name__ == "__main__":
    key = jax.random.PRNGKey(0)
    k1, k2 = jax.random.split(key)

    N, Cin, Cout, H, W = 2, 4, 4, 16, 16
    x = jax.random.normal(k1, (N, Cin, H, W), dtype=jnp.float32)
    conv_w = 0.1 * jax.random.normal(k2, (Cout, Cin, 3, 3), dtype=jnp.float32)
    gamma = jnp.ones((Cout,), jnp.float32)    # nn.BatchNorm2d default weight
    beta = jnp.zeros((Cout,), jnp.float32)    # nn.BatchNorm2d default bias

    out = decode_block_forward(x, conv_w, gamma, beta)
    out = jax.block_until_ready(out)
    assert out.shape == (N, Cout, 2 * H, 2 * W)

    ref = ref_forward(x, conv_w, gamma, beta)
    err = float(jnp.max(jnp.abs(out - ref)))
    # Tolerance covers MXU f32-matmul emulation vs HIGHEST-precision einsum/conv in the
    # reference; any structural bug (wrong tap shift / weight layout) yields O(1) error.
    if err > 2e-2:
        raise SystemExit(f"mismatch vs reference: max abs err = {err}")

    print("KERNEL_OK")
</pallas_src>

<mosaic_0001>
module attributes {stable_mosaic.version = 11 : i64} {
  func.func @_roll_probe_kernel(%arg0: memref<8x128xf32, #tpu.memory_space<vmem>>, %arg1: memref<8x128xf32, #tpu.memory_space<vmem>>) attributes {dimension_semantics = [], scalar_prefetch = 0 : i64, scratch_operands = 0 : i64, tpu.core_type = #tpu.core_type<tc>} {
    %c0 = arith.constant 0 : index
    %c0_0 = arith.constant 0 : index
    %0 = vector.load %arg0[%c0, %c0_0] : memref<8x128xf32, #tpu.memory_space<vmem>>, vector<8x128xf32>
    %c1_i32 = arith.constant 1 : i32
    %1 = tpu.dynamic_rotate %0 by %c1_i32 dim 1 : vector<8x128xf32>, i32 -> vector<8x128xf32>
    %c0_1 = arith.constant 0 : index
    %c0_2 = arith.constant 0 : index
    %2 = vector.load %arg1[%c0_1, %c0_2] : memref<8x128xf32, #tpu.memory_space<vmem>>, vector<8x128xf32>
    tpu.vector_store %arg1[%c0_1, %c0_2], %1 {strides = array<i32>} : memref<8x128xf32, #tpu.memory_space<vmem>>, vector<8x128xf32>,
    return
  }
}

</mosaic_0001>

<llo_original>
// kernel: tpu_custom_call.1
$region0: #{tpu_custom_call.1}
  #allocation0 [shape = 'u32[]', space=smem, size = 0x4, offset = 0x4, fixed_abs, tag = 'smem constant byte address 0x4 - core index']
  #allocation1 [shape = 'u32[72,128]{1,0:T(1,128)}', space=vmem, size = 0x9000, scoped, tag = 'internal scratch']
  %s0 = inlined_call_operand.hbm [shape: f32[8,128], index: 0, kind: input, shape index: {}]
  %s1 = inlined_call_operand.hbm [shape: f32[8,128], index: 1, kind: output, shape index: {}]
  %s2 = sld [smem:[#allocation0]]
  $region18: #{tpu_custom_call.1} parent=0
    _
  %s4 = ssub.s32 1, %s2
  %s5 = scalar_select 0, %s4, %s2
  $region1: #{tpu_custom_call.1} parent=0
    #allocation2 [shape = 'u8[4096]{0}', space=vmem, size = 0x1000, scoped, tag = 'input window, operand 0, single buffered']
    #allocation3 [shape = 's32[1]{0}', space=sflag, size = 0x4, scoped, tag = 'scoped memory for tpu_custom_call.1']
    #allocation4 [shape = 's32[1]{0}', space=sflag, size = 0x4, scoped, tag = 'scoped memory for tpu_custom_call.1']
    #allocation5 [shape = 'u8[4096]{0}', space=vmem, size = 0x1000, scoped, tag = 'output window, operand 0, single buffered']
    %6 = vsyncpa [#allocation3], 0
    %7 = vsyncpa [#allocation4], 0
    // Predicated region
    $region2: #{tpu_custom_call.1} parent=1 // pred_check
      _
    $region3: #{tpu_custom_call.1} parent=1 // pred_check_branch
      %9 = sbr.rel (0) target = $region5
    $region4: #{tpu_custom_call.1} parent=1 // pred_region
      %11 = vsyncadd [#allocation3], 0
      %s13 = sshll.u32 %s0, 4
      %s14 = int_to_ptr.hbm [resolvable:$true] %s13
      %s15 = sshll.u32 [#allocation2], 4
      %s16 = int_to_ptr.vmem [resolvable:$true] %s15
      %18 = dma.hbm_to_vmem [thread:$0]  %s14, 128, %s16, [#allocation3]
    $region5: #{tpu_custom_call.1} parent=1 // pred_fallthru
      _
    // Predicated region
    $region6: #{tpu_custom_call.1} parent=1 // pred_check
      _
    $region7: #{tpu_custom_call.1} parent=1 // pred_check_branch
      %20 = sbr.rel (0) target = $region9
    $region8: #{tpu_custom_call.1} parent=1 // pred_region
      %22 = dma.done [#allocation3], 128
    $region9: #{tpu_custom_call.1} parent=1 // pred_fallthru
      _
    %v23 = vld [vmem:[#allocation2] sm:$0xff]
    %24 = vrot.lane.b32.xlu0 %v23, 1
    %v25 = vpop.permute.xlu0 %24
    %26 = vst [vmem:[#allocation5] sm:$0xff] %v25
    // Predicated region
    $region10: #{tpu_custom_call.1} parent=1 // pred_check
      _
    $region11: #{tpu_custom_call.1} parent=1 // pred_check_branch
      %28 = sbr.rel (0) target = $region13
    $region12: #{tpu_custom_call.1} parent=1 // pred_region
      %30 = vsyncadd [#allocation4], 0
      %s32 = sshll.u32 [#allocation5], 4
      %s33 = int_to_ptr.vmem [resolvable:$true] %s32
      %s34 = sshll.u32 %s1, 4
      %s35 = int_to_ptr.hbm [resolvable:$true] %s34
      %37 = dma.vmem_to_hbm [thread:$0]  %s33, 128, %s35, [#allocation4]
    $region13: #{tpu_custom_call.1} parent=1 // pred_fallthru
      _
    // Predicated region
    $region14: #{tpu_custom_call.1} parent=1 // pred_check
      _
    $region15: #{tpu_custom_call.1} parent=1 // pred_check_branch
      %39 = sbr.rel (0) target = $region17
    $region16: #{tpu_custom_call.1} parent=1 // pred_region
      %41 = dma.done [#allocation4], 128
    $region17: #{tpu_custom_call.1} parent=1 // pred_fallthru
      _
    %42 = vsyncpa [#allocation3], 1
    %43 = vsyncpa [#allocation4], 1

</llo_original>
